<compile_context>
chip_gen: v7x
topology: tpu7x:2x2x1
jax: 0.10.0
libtpu: 0.0.40
codegen_flags: <defaults>
</compile_context>

<pallas_src>
import jax
import jax.numpy as jnp
from jax import lax
from jax.experimental import pallas as pl
from jax.experimental.pallas import tpu as pltpu


def fold_bn(gamma, beta, mean, var, eps=1e-5):
    scale = gamma / jnp.sqrt(var + eps)
    bias = beta - mean * scale
    return scale, bias


def fusion_kernel(xd_ref, xu_ref, wd_ref, wu_ref, bd_ref, bu_ref, o_ref):
    # down branch: 2x2/s2 conv over a whole 2x2 output patch as one bf16 matmul
    # (BN scale already folded into the weight); f32 accumulation, f32 bias.
    down = jnp.dot(xd_ref[...], wd_ref[...], preferred_element_type=jnp.float32)
    down = down + bd_ref[...]
    # up branch: 1x1 conv + BN + SiLU computed once per *low-res* pixel; the
    # nearest 2x upsample is baked into the column-tiled weight/bias, so the
    # result already covers the full 2x2 output patch.
    up = jnp.dot(xu_ref[...], wu_ref[...], preferred_element_type=jnp.float32)
    up = up + bu_ref[...]
    up = up * jax.nn.sigmoid(up)          # SiLU, f32 epilogue (v5e has no bf16 VPU/EUP)
    o_ref[...] = (up + down).astype(o_ref.dtype)


def _pick_tile(m4, cap=512):
    """Largest multiple-of-8 divisor of m4 <= cap; keep >=2 grid steps if possible."""
    best = None
    for t in range(8, min(m4, cap) + 1, 8):
        if m4 % t == 0:
            best = t
    if best is None:
        return m4                      # fall back to one full-extent block
    if best == m4 and m4 >= 16 and (m4 // 2) % 8 == 0:
        best = m4 // 2                 # grid >= 2 so v7x megacore can shard
    return best


def fusion_forward(c_down, c_up, w_down, bn_down, w_up, bn_up, *, tm4=None):
    N, C0, H2, W2 = c_down.shape
    C1 = w_down.shape[0]
    C2 = c_up.shape[1]
    Hout, Wout = H2 // 2, W2 // 2
    assert Hout % 2 == 0 and Wout % 2 == 0
    H4, W4 = Hout // 2, Wout // 2               # low-resolution (c_up) grid
    assert c_up.shape == (N, C2, H4, W4)
    M4 = N * H4 * W4                            # rows = low-res pixels
    if tm4 is None:
        tm4 = _pick_tile(M4)
    assert M4 % tm4 == 0

    # ---- glue: one layout pass per tensor, output written as bf16 ----
    # space-to-depth c_down by 4x4 patches: rows = (n, h4, w4), cols = (r, c, ci)
    xd = c_down.reshape(N, C0, H4, 4, W4, 4)
    xd = jnp.transpose(xd, (0, 2, 4, 3, 5, 1)).reshape(M4, 16 * C0)
    xd = xd.astype(jnp.bfloat16)
    # c_up at low resolution: rows = (n, h4, w4), cols = ci
    xu = jnp.transpose(c_up, (0, 2, 3, 1)).reshape(M4, C2).astype(jnp.bfloat16)

    # ---- weights: fold BN scale, build patch-level matmul operands ----
    sd, bd = fold_bn(*bn_down)
    su, bu = fold_bn(*bn_up)

    # down: block-structured weight mapping (r,c,ci) -> (dy,dx,c1)
    wd_s = jnp.transpose(w_down, (2, 3, 1, 0)) * sd          # (kh, kw, ci, c1)
    Wd = jnp.zeros((4, 4, C0, 2, 2, C1), jnp.float32)
    for dy in range(2):
        for dx in range(2):
            for kh in range(2):
                for kw in range(2):
                    Wd = Wd.at[2 * dy + kh, 2 * dx + kw, :, dy, dx, :].set(wd_s[kh, kw])
    Wd = Wd.reshape(16 * C0, 4 * C1).astype(jnp.bfloat16)
    bd4 = jnp.tile(bd, 4).reshape(1, 4 * C1).astype(jnp.float32)

    # up: 1x1 conv weight, column-tiled 4x so one matmul fills the 2x2 patch
    wu_s = jnp.transpose(w_up[:, :, 0, 0]) * su              # (C2, C1)
    Wu = jnp.tile(wu_s, (1, 4)).astype(jnp.bfloat16)         # (C2, 4*C1)
    bu4 = jnp.tile(bu, 4).reshape(1, 4 * C1).astype(jnp.float32)

    # ---- fused Pallas kernel ----
    out4 = pl.pallas_call(
        fusion_kernel,
        out_shape=jax.ShapeDtypeStruct((M4, 4 * C1), jnp.float32),
        grid_spec=pltpu.PrefetchScalarGridSpec(
            num_scalar_prefetch=0,
            grid=(M4 // tm4,),
            in_specs=[
                pl.BlockSpec((tm4, 16 * C0), lambda i: (i, 0)),
                pl.BlockSpec((tm4, C2), lambda i: (i, 0)),
                pl.BlockSpec((16 * C0, 4 * C1), lambda i: (0, 0)),  # resident weights
                pl.BlockSpec((C2, 4 * C1), lambda i: (0, 0)),
                pl.BlockSpec((1, 4 * C1), lambda i: (0, 0)),
                pl.BlockSpec((1, 4 * C1), lambda i: (0, 0)),
            ],
            out_specs=pl.BlockSpec((tm4, 4 * C1), lambda i: (i, 0)),
        ),
        compiler_params=pltpu.CompilerParams(
            dimension_semantics=("parallel",)),
    )(xd, xu, Wd, Wu, bd4, bu4)

    # unpack (n, h4, w4, dy, dx, c1) -> NCHW.  (Skippable if the consumer takes NHWC.)
    out = out4.reshape(N, H4, W4, 2, 2, C1)
    out = jnp.transpose(out, (0, 5, 1, 3, 2, 4)).reshape(N, C1, Hout, Wout)
    return out


def fusion_reference(c_down, c_up, w_down, bn_down, w_up, bn_up):
    """Pure-JAX f32 reference matching the PyTorch forward (eval-mode BN)."""
    sd, bd = fold_bn(*bn_down)
    su, bu = fold_bn(*bn_up)
    yd = lax.conv_general_dilated(c_down, w_down, (2, 2), 'VALID',
                                  dimension_numbers=('NCHW', 'OIHW', 'NCHW'))
    yd = yd * sd[None, :, None, None] + bd[None, :, None, None]
    yu = lax.conv_general_dilated(c_up, w_up, (1, 1), 'VALID',
                                  dimension_numbers=('NCHW', 'OIHW', 'NCHW'))
    yu = yu * su[None, :, None, None] + bu[None, :, None, None]
    yu = yu * jax.nn.sigmoid(yu)
    yu = jnp.repeat(jnp.repeat(yu, 2, axis=2), 2, axis=3)     # nearest x2
    return yu + yd


if __name__ == "__main__":
    key = jax.random.PRNGKey(0)
    N = 2
    channels = [16, 32, 64, 128]
    level = 1
    C0, C1, C2 = channels[level - 1], channels[level], channels[level + 1]
    Hout, Wout = 16, 16

    ks = jax.random.split(key, 12)
    c_down = jax.random.normal(ks[0], (N, C0, 2 * Hout, 2 * Wout), jnp.float32)
    c_up = jax.random.normal(ks[1], (N, C2, Hout // 2, Wout // 2), jnp.float32)

    # down = Conv(C0, C1, k=2, s=2, p=0, act=False): conv (bias=False) + BN
    w_down = 0.1 * jax.random.normal(ks[2], (C1, C0, 2, 2), jnp.float32)
    bn_down = (1.0 + 0.1 * jax.random.normal(ks[3], (C1,), jnp.float32),
               0.1 * jax.random.normal(ks[4], (C1,), jnp.float32),
               0.1 * jax.random.normal(ks[5], (C1,), jnp.float32),
               jnp.abs(jax.random.normal(ks[6], (C1,), jnp.float32)) + 0.5)

    # up = Conv(C2, C1, k=1, s=1, act=SiLU) followed by nearest Upsample(2x)
    w_up = 0.1 * jax.random.normal(ks[7], (C1, C2, 1, 1), jnp.float32)
    bn_up = (1.0 + 0.1 * jax.random.normal(ks[8], (C1,), jnp.float32),
             0.1 * jax.random.normal(ks[9], (C1,), jnp.float32),
             0.1 * jax.random.normal(ks[10], (C1,), jnp.float32),
             jnp.abs(jax.random.normal(ks[11], (C1,), jnp.float32)) + 0.5)

    out = fusion_forward(c_down, c_up, w_down, bn_down, w_up, bn_up)
    out = jax.block_until_ready(out)

    ref = fusion_reference(c_down, c_up, w_down, bn_down, w_up, bn_up)
    assert out.shape == (N, C1, Hout, Wout)
    # bf16 matmul inputs (f32 accumulation / epilogue) => loosened tolerance vs f32 ref
    assert jnp.allclose(out, ref, rtol=5e-2, atol=5e-2), \
        float(jnp.max(jnp.abs(out - ref)))

    print("KERNEL_OK")
</pallas_src>

<mosaic_0001>
module attributes {stable_mosaic.version = 11 : i64} {
  func.func @fusion_kernel(%arg0: i32, %arg1: memref<64x256xbf16, #tpu.memory_space<vmem>>, %arg2: memref<64x64xbf16, #tpu.memory_space<vmem>>, %arg3: memref<256x128xbf16, #tpu.memory_space<vmem>>, %arg4: memref<64x128xbf16, #tpu.memory_space<vmem>>, %arg5: memref<1x128xf32, #tpu.memory_space<vmem>>, %arg6: memref<1x128xf32, #tpu.memory_space<vmem>>, %arg7: memref<64x128xf32, #tpu.memory_space<vmem>>) attributes {dimension_semantics = [#tpu.dimension_semantics<parallel>], iteration_bounds = array<i64: 2>, scalar_prefetch = 0 : i64, scratch_operands = 0 : i64, tpu.core_type = #tpu.core_type<tc>, window_params = [{transform_indices = @transform_0, window_bounds = array<i64: 64, 256>}, {transform_indices = @transform_1, window_bounds = array<i64: 64, 64>}, {pipeline_mode = #tpu.pipeline_mode<synchronous>, transform_indices = @transform_2, window_bounds = array<i64: 256, 128>}, {pipeline_mode = #tpu.pipeline_mode<synchronous>, transform_indices = @transform_3, window_bounds = array<i64: 64, 128>}, {pipeline_mode = #tpu.pipeline_mode<synchronous>, transform_indices = @transform_4, window_bounds = array<i64: 1, 128>}, {pipeline_mode = #tpu.pipeline_mode<synchronous>, transform_indices = @transform_5, window_bounds = array<i64: 1, 128>}, {transform_indices = @transform_6, window_bounds = array<i64: 64, 128>}]} {
    %c0 = arith.constant 0 : index
    %c0_0 = arith.constant 0 : index
    %0 = vector.load %arg1[%c0, %c0_0] : memref<64x256xbf16, #tpu.memory_space<vmem>>, vector<64x256xbf16>
    %c0_1 = arith.constant 0 : index
    %c0_2 = arith.constant 0 : index
    %1 = vector.load %arg3[%c0_1, %c0_2] : memref<256x128xbf16, #tpu.memory_space<vmem>>, vector<256x128xbf16>
    %cst = arith.constant dense<0.000000e+00> : vector<64x128xf32>
    %2 = tpu.matmul %0, %1, %cst {dimension_numbers = #tpu.dot_dimension_numbers<[1], [0], [0], [1], [0, 0, 1, 1], [], []>} : vector<64x256xbf16>, vector<256x128xbf16>, vector<64x128xf32> -> vector<64x128xf32>
    %c0_3 = arith.constant 0 : index
    %c0_4 = arith.constant 0 : index
    %3 = vector.load %arg5[%c0_3, %c0_4] : memref<1x128xf32, #tpu.memory_space<vmem>>, vector<1x128xf32>
    %4 = vector.broadcast %3 : vector<1x128xf32> to vector<64x128xf32>
    %5 = arith.addf %2, %4 : vector<64x128xf32>
    %c0_5 = arith.constant 0 : index
    %c0_6 = arith.constant 0 : index
    %6 = vector.load %arg2[%c0_5, %c0_6] : memref<64x64xbf16, #tpu.memory_space<vmem>>, vector<64x64xbf16>
    %c0_7 = arith.constant 0 : index
    %c0_8 = arith.constant 0 : index
    %7 = vector.load %arg4[%c0_7, %c0_8] : memref<64x128xbf16, #tpu.memory_space<vmem>>, vector<64x128xbf16>
    %cst_9 = arith.constant dense<0.000000e+00> : vector<64x128xf32>
    %8 = tpu.matmul %6, %7, %cst_9 {dimension_numbers = #tpu.dot_dimension_numbers<[1], [0], [0], [1], [0, 0, 1, 1], [], []>} : vector<64x64xbf16>, vector<64x128xbf16>, vector<64x128xf32> -> vector<64x128xf32>
    %c0_10 = arith.constant 0 : index
    %c0_11 = arith.constant 0 : index
    %9 = vector.load %arg6[%c0_10, %c0_11] : memref<1x128xf32, #tpu.memory_space<vmem>>, vector<1x128xf32>
    %10 = vector.broadcast %9 : vector<1x128xf32> to vector<64x128xf32>
    %11 = arith.addf %8, %10 : vector<64x128xf32>
    %12 = arith.negf %11 : vector<64x128xf32>
    %13 = math.exp %12 : vector<64x128xf32>
    %cst_12 = arith.constant 1.000000e+00 : f32
    %14 = vector.broadcast %cst_12 : f32 to vector<64x128xf32>
    %15 = arith.addf %14, %13 : vector<64x128xf32>
    %16 = arith.divf %14, %15 : vector<64x128xf32>
    %17 = arith.mulf %11, %16 : vector<64x128xf32>
    %18 = arith.addf %17, %5 : vector<64x128xf32>
    %c0_13 = arith.constant 0 : index
    %c0_14 = arith.constant 0 : index
    %19 = vector.load %arg7[%c0_13, %c0_14] : memref<64x128xf32, #tpu.memory_space<vmem>>, vector<64x128xf32>
    tpu.vector_store %arg7[%c0_13, %c0_14], %18 {strides = array<i32>} : memref<64x128xf32, #tpu.memory_space<vmem>>, vector<64x128xf32>,
    return
  }
  func.func @transform_0(%arg0: i32) -> (i32, i32) {
    %c0_i32 = arith.constant 0 : i32
    %c0_i32_0 = arith.constant 0 : i32
    return %arg0, %c0_i32 : i32, i32
  }
  func.func @transform_1(%arg0: i32) -> (i32, i32) {
    %c0_i32 = arith.constant 0 : i32
    %c0_i32_0 = arith.constant 0 : i32
    return %arg0, %c0_i32 : i32, i32
  }
  func.func @transform_2(%arg0: i32) -> (i32, i32) {
    %c0_i32 = arith.constant 0 : i32
    %c0_i32_0 = arith.constant 0 : i32
    %c0_i32_1 = arith.constant 0 : i32
    return %c0_i32, %c0_i32_0 : i32, i32
  }
  func.func @transform_3(%arg0: i32) -> (i32, i32) {
    %c0_i32 = arith.constant 0 : i32
    %c0_i32_0 = arith.constant 0 : i32
    %c0_i32_1 = arith.constant 0 : i32
    return %c0_i32, %c0_i32_0 : i32, i32
  }
  func.func @transform_4(%arg0: i32) -> (i32, i32) {
    %c0_i32 = arith.constant 0 : i32
    %c0_i32_0 = arith.constant 0 : i32
    %c0_i32_1 = arith.constant 0 : i32
    return %c0_i32, %c0_i32_0 : i32, i32
  }
  func.func @transform_5(%arg0: i32) -> (i32, i32) {
    %c0_i32 = arith.constant 0 : i32
    %c0_i32_0 = arith.constant 0 : i32
    %c0_i32_1 = arith.constant 0 : i32
    return %c0_i32, %c0_i32_0 : i32, i32
  }
  func.func @transform_6(%arg0: i32) -> (i32, i32) {
    %c0_i32 = arith.constant 0 : i32
    %c0_i32_0 = arith.constant 0 : i32
    return %arg0, %c0_i32 : i32, i32
  }
}

</mosaic_0001>

<llo_original>
// kernel: tpu_custom_call.1
$region0: #{tpu_custom_call.1}
  #allocation0 [shape = 'u32[]', space=smem, size = 0x4, offset = 0x4, fixed_abs, tag = 'smem constant byte address 0x4 - core index']
  #allocation1 [shape = 'u32[144,128]{1,0:T(1,128)}', space=vmem, size = 0x12000, scoped, tag = 'internal scratch']
  %s0 = inlined_call_operand.hbm [shape: bf16[128,256], index: 0, kind: input, shape index: {}]
  %s1 = inlined_call_operand.vmem [shape: bf16[128,64], index: 1, kind: input, shape index: {}]
  %s2 = inlined_call_operand.hbm [shape: bf16[256,128], index: 2, kind: input, shape index: {}]
  %s3 = inlined_call_operand.vmem [shape: bf16[64,128], index: 3, kind: input, shape index: {}]
  %s4 = inlined_call_operand.vmem [shape: f32[1,128], index: 4, kind: input, shape index: {}]
  %s5 = inlined_call_operand.vmem [shape: f32[1,128], index: 5, kind: input, shape index: {}]
  %s6 = inlined_call_operand.hbm [shape: f32[128,128], index: 6, kind: output, shape index: {}]
  %s7 = sld [smem:[#allocation0]]
  $region65: #{tpu_custom_call.1} parent=0
    _
  %s9 = ssub.s32 1, %s7
  %s10 = scalar_select 0, %s9, %s7
  $region1: #{tpu_custom_call.1} parent=0
    #allocation2 [shape = 'u8[65536]{0}', space=vmem, size = 0x10000, scoped, tag = 'input window, operand 0']
    #allocation3 [shape = 's32[2]{0}', space=sflag, size = 0x8, scoped, tag = 'scoped memory for tpu_custom_call.1']
    #allocation4 [shape = 's32[2]{0}', space=sflag, size = 0x8, scoped, tag = 'scoped memory for tpu_custom_call.1']
    #allocation5 [shape = 'u8[65536]{0}', space=vmem, size = 0x10000, scoped, tag = 'input window, operand 2, single buffered']
    #allocation6 [shape = 's32[1]{0}', space=sflag, size = 0x4, scoped, tag = 'scoped memory for tpu_custom_call.1']
    #allocation7 [shape = 'u8[65536]{0}', space=vmem, size = 0x10000, scoped, tag = 'output window, operand 0']
    %11 = vsyncpa [#allocation3], 0
    %s12 = scalar_lea.sflag [#allocation3], 1
    %13 = vsyncpa %s12, 0
    %14 = vsyncpa [#allocation6], 0
    %15 = vsyncpa [#allocation4], 0
    %s16 = scalar_lea.sflag [#allocation4], 1
    %17 = vsyncpa %s16, 0
    loop: start=0, step=1, limit=4
    $region2: #{tpu_custom_call.1} parent=1 // loop_pre_header
      _
    $region3: #{tpu_custom_call.1} parent=1 // loop_header
      %s19 = sphi 0, %s23
      %p20 = scmp.ge.s32.totalorder %s19, 4
      %s29 = sphi 0, %s31
      %s32 = sphi 0, %s29
      %s33 = sphi 0, %s32
      %s49 = sphi 0, %s33
      %s55 = sphi 0, %s57
      %s58 = sphi 0, %s55
      %s59 = sphi 0, %s58
      %s75 = sphi 0, %s59
      %s79 = sphi 0, %s79
      %s81 = sphi 0, %s79
      %s82 = sphi 0, %s81
      %s96 = sphi 0, %s82
      %s100 = sphi 0, %s100
      %s102 = sphi 0, %s100
      %s103 = sphi 0, %s102
      %s117 = sphi 0, %s103
      %s121 = sphi 0, %s121
      %s123 = sphi 0, %s121
      %s124 = sphi 0, %s123
      %s138 = sphi 0, %s124
      %s142 = sphi 0, %s142
      %s144 = sphi 0, %s142
      %s145 = sphi 0, %s144
      %s159 = sphi 0, %s145
      %s165 = sphi 0, %s167
      %s168 = sphi 0, %s165
      %s169 = sphi 0, %s168
      %s185 = sphi 0, %s169
    $region4: #{tpu_custom_call.1} parent=1 // loop_header_branch
      %22 = sbr.rel (%p20) target = $region8
    $region5: #{tpu_custom_call.1} parent=1 // loop_body
      %s24 = ssub.s32 %s19, 1
      %s25 = ssub.s32 %s19, 2
      %s26 = sadd.s32 %s19, 1
      %s27 = ssub.s32 %s19, %s26
      %p28 = scmp.eq.s32.totalorder %s27, 0
      %s30 = sadd.s32 %s29, 1
      %s31 = scalar_select %p28, %s29, %s30
      %p34 = pneg %p28
      %p35 = scmp.eq.s32.totalorder %s19, 1
      %p36 = por %p34, %p35
      %p37 = scmp.ne.s32.totalorder %s29, %s32
      %p38 = scmp.eq.s32.totalorder %s19, 0
      %p39 = por %p37, %p38
      %p40 = scmp.ne.s32.totalorder %s29, %s32
      %p41 = scmp.eq.s32.totalorder %s24, 1
      %p42 = por %p40, %p41
      %p43 = scmp.ne.s32.totalorder %s32, %s33
      %p44 = scmp.eq.s32.totalorder %s24, 0
      %p45 = por %p43, %p44
      %p46 = scmp.ne.s32.totalorder %s32, %s33
      %p47 = scmp.eq.s32.totalorder %s25, 1
      %p48 = por %p46, %p47
      %p50 = scmp.ne.s32.totalorder %s33, %s49
      %p51 = scmp.eq.s32.totalorder %s25, 0
      %p52 = por %p50, %p51
      %s53 = ssub.s32 %s19, %s26
      %p54 = scmp.eq.s32.totalorder %s53, 0
      %s56 = sadd.s32 %s55, 1
      %s57 = scalar_select %p54, %s55, %s56
      %p60 = pneg %p54
      %p61 = scmp.eq.s32.totalorder %s19, 1
      %p62 = por %p60, %p61
      %p63 = scmp.ne.s32.totalorder %s55, %s58
      %p64 = scmp.eq.s32.totalorder %s19, 0
      %p65 = por %p63, %p64
      %p66 = scmp.ne.s32.totalorder %s55, %s58
      %p67 = scmp.eq.s32.totalorder %s24, 1
      %p68 = por %p66, %p67
      %p69 = scmp.ne.s32.totalorder %s58, %s59
      %p70 = scmp.eq.s32.totalorder %s24, 0
      %p71 = por %p69, %p70
      %p72 = scmp.ne.s32.totalorder %s58, %s59
      %p73 = scmp.eq.s32.totalorder %s25, 1
      %p74 = por %p72, %p73
      %p76 = scmp.ne.s32.totalorder %s59, %s75
      %p77 = scmp.eq.s32.totalorder %s25, 0
      %p78 = por %p76, %p77
      %s80 = sadd.s32 %s79, 1
      %p83 = scmp.eq.s32.totalorder %s19, 1
      %p84 = scmp.ne.s32.totalorder %s79, %s81
      %p85 = scmp.eq.s32.totalorder %s19, 0
      %p86 = por %p84, %p85
      %p87 = scmp.ne.s32.totalorder %s79, %s81
      %p88 = scmp.eq.s32.totalorder %s24, 1
      %p89 = por %p87, %p88
      %p90 = scmp.ne.s32.totalorder %s81, %s82
      %p91 = scmp.eq.s32.totalorder %s24, 0
      %p92 = por %p90, %p91
      %p93 = scmp.ne.s32.totalorder %s81, %s82
      %p94 = scmp.eq.s32.totalorder %s25, 1
      %p95 = por %p93, %p94
      %p97 = scmp.ne.s32.totalorder %s82, %s96
      %p98 = scmp.eq.s32.totalorder %s25, 0
      %p99 = por %p97, %p98
      %s101 = sadd.s32 %s100, 1
      %p104 = scmp.eq.s32.totalorder %s19, 1
      %p105 = scmp.ne.s32.totalorder %s100, %s102
      %p106 = scmp.eq.s32.totalorder %s19, 0
      %p107 = por %p105, %p106
      %p108 = scmp.ne.s32.totalorder %s100, %s102
      %p109 = scmp.eq.s32.totalorder %s24, 1
      %p110 = por %p108, %p109
      %p111 = scmp.ne.s32.totalorder %s102, %s103
      %p112 = scmp.eq.s32.totalorder %s24, 0
      %p113 = por %p111, %p112
      %p114 = scmp.ne.s32.totalorder %s102, %s103
      %p115 = scmp.eq.s32.totalorder %s25, 1
      %p116 = por %p114, %p115
      %p118 = scmp.ne.s32.totalorder %s103, %s117
      %p119 = scmp.eq.s32.totalorder %s25, 0
      %p120 = por %p118, %p119
      %s122 = sadd.s32 %s121, 1
      %p125 = scmp.eq.s32.totalorder %s19, 1
      %p126 = scmp.ne.s32.totalorder %s121, %s123
      %p127 = scmp.eq.s32.totalorder %s19, 0
      %p128 = por %p126, %p127
      %p129 = scmp.ne.s32.totalorder %s121, %s123
      %p130 = scmp.eq.s32.totalorder %s24, 1
      %p131 = por %p129, %p130
      %p132 = scmp.ne.s32.totalorder %s123, %s124
      %p133 = scmp.eq.s32.totalorder %s24, 0
      %p134 = por %p132, %p133
      %p135 = scmp.ne.s32.totalorder %s123, %s124
      %p136 = scmp.eq.s32.totalorder %s25, 1
      %p137 = por %p135, %p136
      %p139 = scmp.ne.s32.totalorder %s124, %s138
      %p140 = scmp.eq.s32.totalorder %s25, 0
      %p141 = por %p139, %p140
      %s143 = sadd.s32 %s142, 1
      %p146 = scmp.eq.s32.totalorder %s19, 1
      %p147 = scmp.ne.s32.totalorder %s142, %s144
      %p148 = scmp.eq.s32.totalorder %s19, 0
      %p149 = por %p147, %p148
      %p150 = scmp.ne.s32.totalorder %s142, %s144
      %p151 = scmp.eq.s32.totalorder %s24, 1
      %p152 = por %p150, %p151
      %p153 = scmp.ne.s32.totalorder %s144, %s145
      %p154 = scmp.eq.s32.totalorder %s24, 0
      %p155 = por %p153, %p154
      %p156 = scmp.ne.s32.totalorder %s144, %s145
      %p157 = scmp.eq.s32.totalorder %s25, 1
      %p158 = por %p156, %p157
      %p160 = scmp.ne.s32.totalorder %s145, %s159
      %p161 = scmp.eq.s32.totalorder %s25, 0
      %p162 = por %p160, %p161
      %s163 = ssub.s32 %s19, %s26
      %p164 = scmp.eq.s32.totalorder %s163, 0
      %s166 = sadd.s32 %s165, 1
      %s167 = scalar_select %p164, %s165, %s166
      %p170 = pneg %p164
      %p171 = scmp.eq.s32.totalorder %s19, 1
      %p172 = por %p170, %p171
      %p173 = scmp.ne.s32.totalorder %s165, %s168
      %p174 = scmp.eq.s32.totalorder %s19, 0
      %p175 = por %p173, %p174
      %p176 = scmp.ne.s32.totalorder %s165, %s168
      %p177 = scmp.eq.s32.totalorder %s24, 1
      %p178 = por %p176, %p177
      %p179 = scmp.ne.s32.totalorder %s168, %s169
      %p180 = scmp.eq.s32.totalorder %s24, 0
      %p181 = por %p179, %p180
      %p182 = scmp.ne.s32.totalorder %s168, %s169
      %p183 = scmp.eq.s32.totalorder %s25, 1
      %p184 = por %p182, %p183
      %p186 = scmp.ne.s32.totalorder %s169, %s185
      %p187 = scmp.eq.s32.totalorder %s25, 0
      %p188 = por %p186, %p187
      %p189 = scmp.le.s32.totalorder 1, %s19
      %p190 = scmp.lt.s32.totalorder %s19, 3
      %p191 = pnand %p189, %p190
      %p192 = pneg %p191
      // Predicated region
      $region9: #{tpu_custom_call.1} parent=5 // pred_check
        _
      $region10: #{tpu_custom_call.1} parent=5 // pred_check_branch
        %194 = sbr.rel (%p191) target = $region12
      $region11: #{tpu_custom_call.1} parent=5 // pred_region
        %s195 = ssub.s32 %s19, 1
        // Predicated region
        $region13: #{tpu_custom_call.1} parent=11 // pred_check
          %p196 = pneg %p92
        $region14: #{tpu_custom_call.1} parent=11 // pred_check_branch
          %198 = sbr.rel (%p196) target = $region16
        $region15: #{tpu_custom_call.1} parent=11 // pred_region
          %s200 = ssub.s32 2048, 2048
          %201 = vsyncadd [#allocation6], %s200
          %s202 = sshll.u32 [#allocation5], 4
          %s203 = int_to_ptr.vmem [resolvable:$true] %s202
          %208 = dma.hbm_to_vmem [thread:$0]  %s2, 2048, %s203, [#allocation6], 64, 64, 4
        $region16: #{tpu_custom_call.1} parent=11 // pred_fallthru
          _
        // Predicated region
        $region17: #{tpu_custom_call.1} parent=11 // pred_check
          %p209 = pneg %p113
        $region18: #{tpu_custom_call.1} parent=11 // pred_check_branch
          %211 = sbr.rel (%p209) target = $region20
        $region19: #{tpu_custom_call.1} parent=11 // pred_region
          _
        $region20: #{tpu_custom_call.1} parent=11 // pred_fallthru
          _
        // Predicated region
        $region21: #{tpu_custom_call.1} parent=11 // pred_check
          %p212 = pneg %p134
        $region22: #{tpu_custom_call.1} parent=11 // pred_check_branch
          %214 = sbr.rel (%p212) target = $region24
        $region23: #{tpu_custom_call.1} parent=11 // pred_region
          _
        $region24: #{tpu_custom_call.1} parent=11 // pred_fallthru
          _
        // Predicated region
        $region25: #{tpu_custom_call.1} parent=11 // pred_check
          %p215 = pneg %p155
        $region26: #{tpu_custom_call.1} parent=11 // pred_check_branch
          %217 = sbr.rel (%p215) target = $region28
        $region27: #{tpu_custom_call.1} parent=11 // pred_region
          _
        $region28: #{tpu_custom_call.1} parent=11 // pred_fallthru
          _
      $region12: #{tpu_custom_call.1} parent=5 // pred_fallthru
        _
      %p218 = scmp.lt.s32.totalorder %s19, 2
      // Predicated region
      $region29: #{tpu_custom_call.1} parent=5 // pred_check
        %p219 = pneg %p218
      $region30: #{tpu_custom_call.1} parent=5 // pred_check_branch
        %221 = sbr.rel (%p219) target = $region32
      $region31: #{tpu_custom_call.1} parent=5 // pred_region
        // Predicated region
        $region33: #{tpu_custom_call.1} parent=31 // pred_check
          %p222 = pneg %p39
        $region34: #{tpu_custom_call.1} parent=31 // pred_check_branch
          %224 = sbr.rel (%p222) target = $region36
        $region35: #{tpu_custom_call.1} parent=31 // pred_region
          %s225 = sand.u32 %s29, 1
          %s226 = scalar_lea.sflag [#allocation3], %s225
          %s227 = sand.u32 %s29, 1
          %s228 = smul.addr %s227, 64
          %s229 = scalar_lea.vmem [#allocation2], %s228
          %s230 = smul.u32 8, %s19
          %s232 = ssub.s32 1024, 1024
          %233 = vsyncadd %s226, %s232
          %s234 = smul.addr %s230, 2
          %s235 = smul.addr %s234, 64
          %s236 = scalar_lea.hbm %s0, %s235
          %s237 = sshll.u32 %s229, 4
          %s238 = int_to_ptr.vmem [resolvable:$true] %s237
          %243 = dma.hbm_to_vmem [thread:$0]  %s236, 1024, %s238, %s226, 128, 128, 8
        $region36: #{tpu_custom_call.1} parent=31 // pred_fallthru
          _
        // Predicated region
        $region37: #{tpu_custom_call.1} parent=31 // pred_check
          %p244 = pneg %p65
        $region38: #{tpu_custom_call.1} parent=31 // pred_check_branch
          %246 = sbr.rel (%p244) target = $region40
        $region39: #{tpu_custom_call.1} parent=31 // pred_region
          %s247 = smul.u32 8, %s19
          %p248 = scmp.lt.s32.totalorder %s247, 15
          %s249 = scalar_select %p248, %s247, 15
          %s250 = smul.addr %s249, 4
          %s251 = scalar_lea.vmem %s1, %s250
          %s252 = smul.u32 8, %s19
        $region40: #{tpu_custom_call.1} parent=31 // pred_fallthru
          _
      $region32: #{tpu_custom_call.1} parent=5 // pred_fallthru
        _
      %p253 = scmp.le.s32.totalorder 1, %s19
      %p254 = scmp.lt.s32.totalorder %s19, 3
      %p255 = pnand %p253, %p254
      %p256 = pneg %p255
      // Predicated region
      $region41: #{tpu_custom_call.1} parent=5 // pred_check
        _
      $region42: #{tpu_custom_call.1} parent=5 // pred_check_branch
        %258 = sbr.rel (%p255) target = $region44
      $region43: #{tpu_custom_call.1} parent=5 // pred_region
        %s259 = ssub.s32 %s19, 1
        %s260 = sand.u32 %s32, 1
        %s261 = scalar_lea.sflag [#allocation3], %s260
        %s262 = sand.u32 %s32, 1
        %s263 = smul.addr %s262, 64
        %s264 = scalar_lea.vmem [#allocation2], %s263
        // Predicated region
        $region45: #{tpu_custom_call.1} parent=43 // pred_check
          %p265 = pneg %p45
        $region46: #{tpu_custom_call.1} parent=43 // pred_check_branch
          %267 = sbr.rel (%p265) target = $region48
        $region47: #{tpu_custom_call.1} parent=43 // pred_region
          %268 = dma.done %s261, 1024
        $region48: #{tpu_custom_call.1} parent=43 // pred_fallthru
          _
        // Predicated region
        $region49: #{tpu_custom_call.1} parent=43 // pred_check
          %p269 = pneg %p92
        $region50: #{tpu_custom_call.1} parent=43 // pred_check_branch
          %271 = sbr.rel (%p269) target = $region52
        $region51: #{tpu_custom_call.1} parent=43 // pred_region
          %272 = dma.done [#allocation6], 2048
        $region52: #{tpu_custom_call.1} parent=43 // pred_fallthru
          _
        %s273 = sand.u32 %s32, 1
        %s274 = scalar_lea.sflag [#allocation3], %s273
        %s275 = sand.u32 %s32, 1
        %s276 = smul.addr %s275, 64
        %s277 = scalar_lea.vmem [#allocation2], %s276
        %p278 = pneg %p45
        %p279 = pneg %p42
        %s280 = smul.u32 8, %s24
        %p281 = scmp.lt.s32.totalorder %s280, 15
        %s282 = scalar_select %p281, %s280, 15
        %s283 = smul.addr %s282, 4
        %s284 = scalar_lea.vmem %s1, %s283
        %p285 = pneg %p71
        %p286 = pneg %p68
        %p287 = pneg %p92
        %p288 = pneg %p89
        %p289 = pneg %p113
        %p290 = pneg %p110
        %p291 = pneg %p134
        %p292 = pneg %p131
        %p293 = pneg %p155
        %p294 = pneg %p152
        %p295 = pneg %p181
        %p296 = pneg %p178
        %s297 = sand.u32 %s168, 1
        %s298 = scalar_lea.sflag [#allocation4], %s297
        %s299 = sand.u32 %s168, 1
        %s300 = smul.addr %s299, 64
        %s301 = scalar_lea.vmem [#allocation7], %s300
        %s302 = smul.u32 8, %s24
        %s303 = smul.u32 8, %s24
        %p304 = scmp.lt.s32.totalorder %s303, 15
        %s305 = scalar_select %p304, %s303, 15
        %s306 = smul.addr %s305, 4
        %s307 = scalar_lea.vmem %s1, %s306
        %s308 = smul.u32 8, %s24
        %s309 = smul.u32 8, %s24
        %v311 = vld [vmem:[%s264] sm:$0xff]
        %v312 = vld [vmem:[%s264 + $0x8] sm:$0xff]
        %v313 = vld [vmem:[%s264 + $0x10] sm:$0xff]
        %v314 = vld [vmem:[%s264 + $0x18] sm:$0xff]
        %v315 = vld [vmem:[%s264 + $0x20] sm:$0xff]
        %v316 = vld [vmem:[%s264 + $0x28] sm:$0xff]
        %v317 = vld [vmem:[%s264 + $0x30] sm:$0xff]
        %v318 = vld [vmem:[%s264 + $0x38] sm:$0xff]
        %v319 = vld [vmem:[#allocation5] sm:$0xf]
        %v320 = vld [vmem:[#allocation5 + $0x4] sm:$0xf]
        %v321 = vld [vmem:[#allocation5 + $0x8] sm:$0xf]
        %v322 = vld [vmem:[#allocation5 + $0xc] sm:$0xf]
        %v323 = vld [vmem:[#allocation5 + $0x10] sm:$0xf]
        %v324 = vld [vmem:[#allocation5 + $0x14] sm:$0xf]
        %v325 = vld [vmem:[#allocation5 + $0x18] sm:$0xf]
        %v326 = vld [vmem:[#allocation5 + $0x1c] sm:$0xf]
        %v327 = vld [vmem:[#allocation5 + $0x20] sm:$0xf]
        %v328 = vld [vmem:[#allocation5 + $0x24] sm:$0xf]
        %v329 = vld [vmem:[#allocation5 + $0x28] sm:$0xf]
        %v330 = vld [vmem:[#allocation5 + $0x2c] sm:$0xf]
        %v331 = vld [vmem:[#allocation5 + $0x30] sm:$0xf]
        %v332 = vld [vmem:[#allocation5 + $0x34] sm:$0xf]
        %v333 = vld [vmem:[#allocation5 + $0x38] sm:$0xf]
        %v334 = vld [vmem:[#allocation5 + $0x3c] sm:$0xf]
        %v335 = vld [vmem:[#allocation5 + $0x40] sm:$0xf]
        %v336 = vld [vmem:[#allocation5 + $0x44] sm:$0xf]
        %v337 = vld [vmem:[#allocation5 + $0x48] sm:$0xf]
        %v338 = vld [vmem:[#allocation5 + $0x4c] sm:$0xf]
        %v339 = vld [vmem:[#allocation5 + $0x50] sm:$0xf]
        %v340 = vld [vmem:[#allocation5 + $0x54] sm:$0xf]
        %v341 = vld [vmem:[#allocation5 + $0x58] sm:$0xf]
        %v342 = vld [vmem:[#allocation5 + $0x5c] sm:$0xf]
        %v343 = vld [vmem:[#allocation5 + $0x60] sm:$0xf]
        %v344 = vld [vmem:[#allocation5 + $0x64] sm:$0xf]
        %v345 = vld [vmem:[#allocation5 + $0x68] sm:$0xf]
        %v346 = vld [vmem:[#allocation5 + $0x6c] sm:$0xf]
        %v347 = vld [vmem:[#allocation5 + $0x70] sm:$0xf]
        %v348 = vld [vmem:[#allocation5 + $0x74] sm:$0xf]
        %v349 = vld [vmem:[#allocation5 + $0x78] sm:$0xf]
        %v350 = vld [vmem:[#allocation5 + $0x7c] sm:$0xf]
        %v351 = vld [vmem:[%s4] sm:$0x1]
        %v353 = vlaneseq
        %v354 = vshrl.u32 %v353, 7
        %v355 = vsub.s32 0, %v354
        %v356 = vrot.slane %v351, %v355
        %v366 = vunpack.c.l.b16 %v311
        %v367 = vunpack.c.h.b16 %v311
        %v368 = vunpack.c.l.b16 %v312
        %v369 = vunpack.c.h.b16 %v312
        %v370 = vunpack.c.l.b16 %v313
        %v371 = vunpack.c.h.b16 %v313
        %v372 = vunpack.c.l.b16 %v314
        %v373 = vunpack.c.h.b16 %v314
        %v374 = vunpack.c.l.b16 %v315
        %v375 = vunpack.c.h.b16 %v315
        %v376 = vunpack.c.l.b16 %v316
        %v377 = vunpack.c.h.b16 %v316
        %v378 = vunpack.c.l.b16 %v317
        %v379 = vunpack.c.h.b16 %v317
        %v380 = vunpack.c.l.b16 %v318
        %v381 = vunpack.c.h.b16 %v318
        %v382 = vpack.c.b16 %v368, %v366
        %v383 = vpack.c.b16 %v369, %v367
        %v384 = vpack.c.b16 %v372, %v370
        %v385 = vpack.c.b16 %v373, %v371
        %v386 = vpack.c.b16 %v376, %v374
        %v387 = vpack.c.b16 %v377, %v375
        %v388 = vpack.c.b16 %v380, %v378
        %v389 = vpack.c.b16 %v381, %v379
        %v430 = vunpack.c.l.b16 %v319
        %v431 = vunpack.c.l.b16 %v320
        %v432 = vunpack.c.l.b16 %v321
        %v433 = vunpack.c.l.b16 %v322
        %v434 = vunpack.c.l.b16 %v323
        %v435 = vunpack.c.l.b16 %v324
        %v436 = vunpack.c.l.b16 %v325
        %v437 = vunpack.c.l.b16 %v326
        %v438 = vunpack.c.l.b16 %v327
        %v439 = vunpack.c.l.b16 %v328
        %v440 = vunpack.c.l.b16 %v329
        %v441 = vunpack.c.l.b16 %v330
        %v442 = vunpack.c.l.b16 %v331
        %v443 = vunpack.c.l.b16 %v332
        %v444 = vunpack.c.l.b16 %v333
        %v445 = vunpack.c.l.b16 %v334
        %v446 = vunpack.c.l.b16 %v335
        %v447 = vunpack.c.l.b16 %v336
        %v448 = vunpack.c.l.b16 %v337
        %v449 = vunpack.c.l.b16 %v338
        %v450 = vunpack.c.l.b16 %v339
        %v451 = vunpack.c.l.b16 %v340
        %v452 = vunpack.c.l.b16 %v341
        %v453 = vunpack.c.l.b16 %v342
        %v454 = vunpack.c.l.b16 %v343
        %v455 = vunpack.c.l.b16 %v344
        %v456 = vunpack.c.l.b16 %v345
        %v457 = vunpack.c.l.b16 %v346
        %v458 = vunpack.c.l.b16 %v347
        %v459 = vunpack.c.l.b16 %v348
        %v460 = vunpack.c.l.b16 %v349
        %v461 = vunpack.c.l.b16 %v350
        %v462 = vpack.c.b16 %v431, %v430
        %v463 = vpack.c.b16 %v433, %v432
        %v464 = vpack.c.b16 %v435, %v434
        %v465 = vpack.c.b16 %v437, %v436
        %v466 = vpack.c.b16 %v439, %v438
        %v467 = vpack.c.b16 %v441, %v440
        %v468 = vpack.c.b16 %v443, %v442
        %v469 = vpack.c.b16 %v445, %v444
        %v470 = vpack.c.b16 %v447, %v446
        %v471 = vpack.c.b16 %v449, %v448
        %v472 = vpack.c.b16 %v451, %v450
        %v473 = vpack.c.b16 %v453, %v452
        %v474 = vpack.c.b16 %v455, %v454
        %v475 = vpack.c.b16 %v457, %v456
        %v476 = vpack.c.b16 %v459, %v458
        %v477 = vpack.c.b16 %v461, %v460
        %494 = vmatprep.subr.bf16.mxu0 0
        %495 = vmatpush1.bf16.msra.mxu0 %v462
        %496 = vmatprep.subr.bf16.mxu0 0
        %497 = vmatpush1.bf16.msra.mxu0 %v463
        %498 = vmatprep.subr.bf16.mxu0 0
        %499 = vmatpush1.bf16.msra.mxu0 %v464
        %500 = vmatprep.subr.bf16.mxu0 0
        %501 = vmatpush1.bf16.msra.mxu0 %v465
        %502 = vmatprep.subr.bf16.mxu0 0
        %503 = vmatpush1.bf16.msra.mxu0 %v466
        %504 = vmatprep.subr.bf16.mxu0 0
        %505 = vmatpush1.bf16.msra.mxu0 %v467
        %506 = vmatprep.subr.bf16.mxu0 0
        %507 = vmatpush1.bf16.msra.mxu0 %v468
        %508 = vmatprep.subr.bf16.mxu0 0
        %509 = vmatpush1.bf16.msra.mxu0 %v469
        %510 = vmatprep.subr.bf16.mxu0 0
        %511 = vmatpush1.bf16.msra.mxu0 %v470
        %512 = vmatprep.subr.bf16.mxu0 0
        %513 = vmatpush1.bf16.msra.mxu0 %v471
        %514 = vmatprep.subr.bf16.mxu0 0
        %515 = vmatpush1.bf16.msra.mxu0 %v472
        %516 = vmatprep.subr.bf16.mxu0 0
        %517 = vmatpush1.bf16.msra.mxu0 %v473
        %518 = vmatprep.subr.bf16.mxu0 0
        %519 = vmatpush1.bf16.msra.mxu0 %v474
        %520 = vmatprep.subr.bf16.mxu0 0
        %521 = vmatpush1.bf16.msra.mxu0 %v475
        %522 = vmatprep.subr.bf16.mxu0 0
        %523 = vmatpush1.bf16.msra.mxu0 %v476
        %524 = vmatprep.subr.bf16.mxu0 0
        %525 = vmatpush1.bf16.msra.mxu0 %v477
        %526 = vmatprep.mubr.bf16.mxu0 %v383
        %527 = vmatmul.mubr.bf16.gmra.mrb[0].mxu0 %v382
        %v528 = vpop.f32.mrb[0].mxu0
        %v529 = vadd.f32 %v356, %v528
        %v530 = vpop.f32.mrb[0].mxu0
        %v531 = vpop.f32.mrb[0].mxu0
        %v532 = vadd.f32 %v356, %v531
        %v533 = vpop.f32.mrb[0].mxu0
        %534 = vmatprep.mubr.bf16.mxu0 %v385
        %535 = vmatmul.mubr.bf16.gmra.mrb[0].mxu0 %v384
        %v536 = vpop.f32.mrb[0].mxu0
        %v537 = vadd.f32 %v356, %v536
        %v538 = vpop.f32.mrb[0].mxu0
        %v539 = vpop.f32.mrb[0].mxu0
        %v540 = vadd.f32 %v356, %v539
        %v541 = vpop.f32.mrb[0].mxu0
        %542 = vmatprep.mubr.bf16.mxu0 %v387
        %543 = vmatmul.mubr.bf16.gmra.mrb[0].mxu0 %v386
        %v544 = vpop.f32.mrb[0].mxu0
        %v545 = vadd.f32 %v356, %v544
        %v546 = vpop.f32.mrb[0].mxu0
        %v547 = vpop.f32.mrb[0].mxu0
        %v548 = vadd.f32 %v356, %v547
        %v549 = vpop.f32.mrb[0].mxu0
        %550 = vmatprep.mubr.bf16.mxu0 %v389
        %551 = vmatmul.mubr.bf16.gmra.mrb[0].mxu0 %v388
        %v552 = vpop.f32.mrb[0].mxu0
        %v553 = vadd.f32 %v356, %v552
        %v554 = vpop.f32.mrb[0].mxu0
        %v555 = vpop.f32.mrb[0].mxu0
        %v556 = vadd.f32 %v356, %v555
        %v557 = vpop.f32.mrb[0].mxu0
        %558 = vdwg.mxu0
        %v559 = vld [vmem:[%s307] sm:$0xf]
        %v560 = vld [vmem:[%s307 + $0x4] sm:$0xf]
        %v561 = vld [vmem:[%s307 + $0x8] sm:$0xf]
        %v562 = vld [vmem:[%s307 + $0xc] sm:$0xf]
        %v563 = vld [vmem:[%s307 + $0x10] sm:$0xf]
        %v564 = vld [vmem:[%s307 + $0x14] sm:$0xf]
        %v565 = vld [vmem:[%s307 + $0x18] sm:$0xf]
        %v566 = vld [vmem:[%s307 + $0x1c] sm:$0xf]
        %v567 = vld [vmem:[%s3] sm:$0xf]
        %v568 = vld [vmem:[%s3 + $0x4] sm:$0xf]
        %v569 = vld [vmem:[%s3 + $0x8] sm:$0xf]
        %v570 = vld [vmem:[%s3 + $0xc] sm:$0xf]
        %v571 = vld [vmem:[%s3 + $0x10] sm:$0xf]
        %v572 = vld [vmem:[%s3 + $0x14] sm:$0xf]
        %v573 = vld [vmem:[%s3 + $0x18] sm:$0xf]
        %v574 = vld [vmem:[%s3 + $0x1c] sm:$0xf]
        %v575 = vld [vmem:[%s5] sm:$0x1]
        %v577 = vlaneseq
        %v578 = vshrl.u32 %v577, 7
        %v579 = vsub.s32 0, %v578
        %v580 = vrot.slane %v575, %v579
        %v590 = vunpack.c.l.b16 %v559
        %v591 = vunpack.c.l.b16 %v560
        %v592 = vunpack.c.l.b16 %v561
        %v593 = vunpack.c.l.b16 %v562
        %v594 = vunpack.c.l.b16 %v563
        %v595 = vunpack.c.l.b16 %v564
        %v596 = vunpack.c.l.b16 %v565
        %v597 = vunpack.c.l.b16 %v566
        %v598 = vpack.c.b16 %v591, %v590
        %v599 = vpack.c.b16 %v593, %v592
        %v600 = vpack.c.b16 %v595, %v594
        %v601 = vpack.c.b16 %v597, %v596
        %v610 = vunpack.c.l.b16 %v567
        %v611 = vunpack.c.l.b16 %v568
        %v612 = vunpack.c.l.b16 %v569
        %v613 = vunpack.c.l.b16 %v570
        %v614 = vunpack.c.l.b16 %v571
        %v615 = vunpack.c.l.b16 %v572
        %v616 = vunpack.c.l.b16 %v573
        %v617 = vunpack.c.l.b16 %v574
        %v618 = vpack.c.b16 %v611, %v610
        %v619 = vpack.c.b16 %v613, %v612
        %v620 = vpack.c.b16 %v615, %v614
        %v621 = vpack.c.b16 %v617, %v616
        %vm626 = vcmask 523264
        %v628 = vsel %vm626, %v598, 0
        %v631 = vsel %vm626, %v599, 0
        %v634 = vsel %vm626, %v600, 0
        %v637 = vsel %vm626, %v601, 0
        %639 = vmatprep.subr.bf16.mxu0 0
        %640 = vmatpush1.bf16.msra.mxu0 %v618
        %641 = vmatprep.subr.bf16.mxu0 0
        %642 = vmatpush1.bf16.msra.mxu0 %v619
        %643 = vmatprep.subr.bf16.mxu0 0
        %644 = vmatpush1.bf16.msra.mxu0 %v620
        %645 = vmatprep.subr.bf16.mxu0 0
        %646 = vmatpush1.bf16.msra.mxu0 %v621
        %647 = vmatprep.subr.bf16.mxu0 0
        %648 = vmatpush1.bf16.msra.mxu0 0
        %649 = vmatprep.subr.bf16.mxu0 0
        %650 = vmatpush1.bf16.msra.mxu0 0
        %651 = vmatprep.subr.bf16.mxu0 0
        %652 = vmatpush1.bf16.msra.mxu0 0
        %653 = vmatprep.subr.bf16.mxu0 0
        %654 = vmatpush1.bf16.msra.mxu0 0
        %655 = vmatprep.subr.bf16.mxu0 0
        %656 = vmatpush1.bf16.msra.mxu0 0
        %657 = vmatprep.subr.bf16.mxu0 0
        %658 = vmatpush1.bf16.msra.mxu0 0
        %659 = vmatprep.subr.bf16.mxu0 0
        %660 = vmatpush1.bf16.msra.mxu0 0
        %661 = vmatprep.subr.bf16.mxu0 0
        %662 = vmatpush1.bf16.msra.mxu0 0
        %663 = vmatprep.subr.bf16.mxu0 0
        %664 = vmatpush1.bf16.msra.mxu0 0
        %665 = vmatprep.subr.bf16.mxu0 0
        %666 = vmatpush1.bf16.msra.mxu0 0
        %667 = vmatprep.subr.bf16.mxu0 0
        %668 = vmatpush1.bf16.msra.mxu0 0
        %669 = vmatprep.subr.bf16.mxu0 0
        %670 = vmatpush1.bf16.msra.mxu0 0
        %671 = vmatprep.mubr.bf16.mxu0 0
        %672 = vmatmul.mubr.bf16.gmra.mrb[0].mxu0 %v628
        %v673 = vpop.f32.mrb[0].mxu0
        %v674 = vadd.f32 %v580, %v673
        %v675 = vpop.f32.mrb[0].mxu0
        %v676 = vpop.f32.mrb[0].mxu0
        %v677 = vadd.f32 %v580, %v676
        %v678 = vpop.f32.mrb[0].mxu0
        %679 = vmatprep.mubr.bf16.mxu0 0
        %680 = vmatmul.mubr.bf16.gmra.mrb[0].mxu0 %v631
        %v681 = vpop.f32.mrb[0].mxu0
        %v682 = vadd.f32 %v580, %v681
        %v683 = vpop.f32.mrb[0].mxu0
        %v684 = vpop.f32.mrb[0].mxu0
        %v685 = vadd.f32 %v580, %v684
        %v686 = vpop.f32.mrb[0].mxu0
        %687 = vmatprep.mubr.bf16.mxu0 0
        %688 = vmatmul.mubr.bf16.gmra.mrb[0].mxu0 %v634
        %v689 = vpop.f32.mrb[0].mxu0
        %v690 = vadd.f32 %v580, %v689
        %v691 = vpop.f32.mrb[0].mxu0
        %v692 = vpop.f32.mrb[0].mxu0
        %v693 = vadd.f32 %v580, %v692
        %v694 = vpop.f32.mrb[0].mxu0
        %695 = vmatprep.mubr.bf16.mxu0 0
        %696 = vmatmul.mubr.bf16.gmra.mrb[0].mxu0 %v637
        %v697 = vpop.f32.mrb[0].mxu0
        %v698 = vadd.f32 %v580, %v697
        %v699 = vpop.f32.mrb[0].mxu0
        %v700 = vpop.f32.mrb[0].mxu0
        %v701 = vadd.f32 %v580, %v700
        %v702 = vpop.f32.mrb[0].mxu0
        %703 = vdwg.mxu0
        %v704 = vxor.u32 %v674, 2147483648
        %v705 = vxor.u32 %v677, 2147483648
        %v706 = vxor.u32 %v682, 2147483648
        %v707 = vxor.u32 %v685, 2147483648
        %v708 = vxor.u32 %v690, 2147483648
        %v709 = vxor.u32 %v693, 2147483648
        %v710 = vxor.u32 %v698, 2147483648
        %v711 = vxor.u32 %v701, 2147483648
        %v712 = vmul.f32 %v704, 1.442695
        %v713 = vpow.pop %v712
        %v714 = vmul.f32 %v705, 1.442695
        %v715 = vpow.pop %v714
        %v716 = vmul.f32 %v706, 1.442695
        %v717 = vpow.pop %v716
        %v718 = vmul.f32 %v707, 1.442695
        %v719 = vpow.pop %v718
        %v720 = vmul.f32 %v708, 1.442695
        %v721 = vpow.pop %v720
        %v722 = vmul.f32 %v709, 1.442695
        %v723 = vpow.pop %v722
        %v724 = vmul.f32 %v710, 1.442695
        %v725 = vpow.pop %v724
        %v726 = vmul.f32 %v711, 1.442695
        %v727 = vpow.pop %v726
        %v728 = vadd.f32 %v713, 1.0
        %v729 = vadd.f32 %v715, 1.0
        %v730 = vadd.f32 %v717, 1.0
        %v731 = vadd.f32 %v719, 1.0
        %v732 = vadd.f32 %v721, 1.0
        %v733 = vadd.f32 %v723, 1.0
        %v734 = vadd.f32 %v725, 1.0
        %v735 = vadd.f32 %v727, 1.0
        %v736 = vrcp.pop %v728
        %v737 = vmul.f32 1.0, %v736
        %v738 = vrcp.pop %v729
        %v739 = vmul.f32 1.0, %v738
        %v740 = vrcp.pop %v730
        %v741 = vmul.f32 1.0, %v740
        %v742 = vrcp.pop %v731
        %v743 = vmul.f32 1.0, %v742
        %v744 = vrcp.pop %v732
        %v745 = vmul.f32 1.0, %v744
        %v746 = vrcp.pop %v733
        %v747 = vmul.f32 1.0, %v746
        %v748 = vrcp.pop %v734
        %v749 = vmul.f32 1.0, %v748
        %v750 = vrcp.pop %v735
        %v751 = vmul.f32 1.0, %v750
        %v752 = vmul.f32 %v674, %v737
        %v753 = vmul.f32 %v677, %v739
        %v754 = vmul.f32 %v682, %v741
        %v755 = vmul.f32 %v685, %v743
        %v756 = vmul.f32 %v690, %v745
        %v757 = vmul.f32 %v693, %v747
        %v758 = vmul.f32 %v698, %v749
        %v759 = vmul.f32 %v701, %v751
        %v760 = vadd.f32 %v752, %v529
        %v761 = vadd.f32 %v753, %v532
        %v762 = vadd.f32 %v754, %v537
        %v763 = vadd.f32 %v755, %v540
        %v764 = vadd.f32 %v756, %v545
        %v765 = vadd.f32 %v757, %v548
        %v766 = vadd.f32 %v758, %v553
        %v767 = vadd.f32 %v759, %v556
        %768 = vst [vmem:[%s301] sm:$0xff] %v760
        %769 = vst [vmem:[%s301 + $0x8] sm:$0xff] %v761
        %770 = vst [vmem:[%s301 + $0x10] sm:$0xff] %v762
        %771 = vst [vmem:[%s301 + $0x18] sm:$0xff] %v763
        %772 = vst [vmem:[%s301 + $0x20] sm:$0xff] %v764
        %773 = vst [vmem:[%s301 + $0x28] sm:$0xff] %v765
        %774 = vst [vmem:[%s301 + $0x30] sm:$0xff] %v766
        %775 = vst [vmem:[%s301 + $0x38] sm:$0xff] %v767
        %s776 = sand.u32 %s168, 1
        %s777 = scalar_lea.sflag [#allocation4], %s776
        %s778 = sand.u32 %s168, 1
        %s779 = smul.addr %s778, 64
        %s780 = scalar_lea.vmem [#allocation7], %s779
        // Predicated region
        $region53: #{tpu_custom_call.1} parent=43 // pred_check
          %p781 = pneg %p178
        $region54: #{tpu_custom_call.1} parent=43 // pred_check_branch
          %783 = sbr.rel (%p781) target = $region56
        $region55: #{tpu_custom_call.1} parent=43 // pred_region
          %s784 = smul.u32 8, %s24
          %s786 = ssub.s32 1024, 1024
          %787 = vsyncadd %s777, %s786
          %s788 = smul.addr %s784, 128
          %s789 = scalar_lea.hbm %s6, %s788
          %s790 = sshll.u32 %s780, 4
          %s791 = int_to_ptr.vmem [resolvable:$true] %s790
          %796 = dma.vmem_to_hbm [thread:$0]  %s791, 1024, %s789, %s777, 128, 128, 8
        $region56: #{tpu_custom_call.1} parent=43 // pred_fallthru
          _
      $region44: #{tpu_custom_call.1} parent=5 // pred_fallthru
        _
      %p797 = scmp.le.s32.totalorder 2, %s19
      // Predicated region
      $region57: #{tpu_custom_call.1} parent=5 // pred_check
        %p798 = pneg %p797
      $region58: #{tpu_custom_call.1} parent=5 // pred_check_branch
        %800 = sbr.rel (%p798) target = $region60
      $region59: #{tpu_custom_call.1} parent=5 // pred_region
        %s801 = ssub.s32 %s19, 2
        // Predicated region
        $region61: #{tpu_custom_call.1} parent=59 // pred_check
          %p802 = pneg %p184
        $region62: #{tpu_custom_call.1} parent=59 // pred_check_branch
          %804 = sbr.rel (%p802) target = $region64
        $region63: #{tpu_custom_call.1} parent=59 // pred_region
          %s805 = sand.u32 %s169, 1
          %s806 = scalar_lea.sflag [#allocation4], %s805
          %s807 = sand.u32 %s169, 1
          %s808 = smul.addr %s807, 64
          %s809 = scalar_lea.vmem [#allocation7], %s808
          %810 = dma.done %s806, 1024
        $region64: #{tpu_custom_call.1} parent=59 // pred_fallthru
          _
      $region60: #{tpu_custom_call.1} parent=5 // pred_fallthru
        _
    $region6: #{tpu_custom_call.1} parent=1 // loop_footer
      %s23 = sadd.s32 1, %s19
    $region7: #{tpu_custom_call.1} parent=1 // loop_footer_branch
      %18 = sbr.rel target = $region3
    $region8: #{tpu_custom_call.1} parent=1 // loop_exit
      _
    %811 = vsyncpa [#allocation3], 1
    %s812 = scalar_lea.sflag [#allocation3], 1
    %813 = vsyncpa %s812, 1
    %814 = vsyncpa [#allocation6], 1
    %815 = vsyncpa [#allocation4], 1
    %s816 = scalar_lea.sflag [#allocation4], 1
    %817 = vsyncpa %s816, 1

</llo_original>
